<compile_context>
chip_gen: v6e
topology: v6e:2x2x1
jax: 0.10.0
libtpu: 0.0.40
codegen_flags: <defaults>
</compile_context>

<pallas_src>
import math

import jax
import jax.numpy as jnp
from jax import lax
from jax.experimental import pallas as pl
from jax.experimental.pallas import tpu as pltpu

_LANES = 128
_SUBLANES = 8
_CHUNK_ROWS = 8          # 8 x 128 x 32-bit == exactly one vreg per array
_TILE_CAP_ROWS = 2048    # 2048 x 128 int32 == 1 MiB per input block
_NUM_CHAINS = 2          # independent select chains per table (VALU ILP)


def _round_up(x, m):
    return (x + m - 1) // m * m


def _tree_sum(parts):
    parts = list(parts)
    while len(parts) > 1:
        nxt = [a + b for a, b in zip(parts[0::2], parts[1::2])]
        if len(parts) % 2:
            nxt.append(parts[-1])
        parts = nxt
    return parts[0]


def _gather_partials(idx, table_ref, num_chains=_NUM_CHAINS):
    """Partial results whose sum equals table[idx] (0.0 for out-of-range idx).

    idx: (chunk, 128) int32 in vregs; table_ref: (n,) f32 in SMEM.
    Unrolled compare/select over the table entries, split across
    `num_chains` independent accumulators for VALU ILP.
    """
    n = table_ref.shape[0]                      # static
    chains = max(1, min(num_chains, n))
    accs = [jnp.zeros(idx.shape, jnp.float32) for _ in range(chains)]
    for k in range(n):
        val = table_ref[k]                      # scalar f32 read from SMEM
        c = k % chains
        accs[c] = jnp.where(idx == k, val, accs[c])
    return accs


def _three_linear_kernel(u_ref, i_ref, v_ref, ut_ref, it_ref, dt_ref, out_ref):
    rows = out_ref.shape[0]
    whole = not (rows > _CHUNK_ROWS and rows % _CHUNK_ROWS == 0)
    chunk = rows if whole else _CHUNK_ROWS
    n_chunks = rows // chunk

    def process(r0):
        sl = pl.ds(r0, chunk)
        parts = (_gather_partials(u_ref[sl, :], ut_ref)
                 + _gather_partials(i_ref[sl, :], it_ref)
                 + _gather_partials(v_ref[sl, :], dt_ref))
        out_ref[sl, :] = _tree_sum(parts)

    if n_chunks == 1:
        process(0)
    else:
        def body(c, carry):
            process(pl.multiple_of(c * chunk, chunk))
            return carry
        lax.fori_loop(0, n_chunks, body, 0, unroll=2)


def three_linear_forward(users, items, values,
                         user_table, item_table, data_table):
    """users/items/values: int index arrays (same shape); tables: (n_*, 1) f32.

    Returns an f32 array with the same shape as the index arrays
    (matches torch's `.squeeze()` for 1-D index inputs with batch > 1).
    """
    orig_shape = users.shape
    u = users.reshape(-1).astype(jnp.int32)
    i = items.reshape(-1).astype(jnp.int32)
    v = values.reshape(-1).astype(jnp.int32)
    count = u.shape[0]

    # Lane-dense slab with minimal padding: aligned case is a free reshape.
    pad = (-count) % _LANES
    if pad:
        u = jnp.pad(u, (0, pad))
        i = jnp.pad(i, (0, pad))
        v = jnp.pad(v, (0, pad))
    rows = (count + pad) // _LANES
    u2 = u.reshape(rows, _LANES)
    i2 = i.reshape(rows, _LANES)
    v2 = v.reshape(rows, _LANES)

    # Big tiles to amortize per-step overhead; keep grid >= 2 when there is
    # enough work so the "parallel" axis can use both TensorCores on v7x.
    if rows < 2 * _SUBLANES:
        row_tile = rows
    else:
        row_tile = min(_TILE_CAP_ROWS,
                       _round_up(pl.cdiv(rows, 2), _SUBLANES))
    grid = (pl.cdiv(rows, row_tile),)

    ut = user_table.reshape(-1).astype(jnp.float32)
    it = item_table.reshape(-1).astype(jnp.float32)
    dt = data_table.reshape(-1).astype(jnp.float32)

    idx_spec = pl.BlockSpec((row_tile, _LANES), lambda r: (r, 0))
    smem_spec = pl.BlockSpec(memory_space=pltpu.MemorySpace.SMEM)

    out = pl.pallas_call(
        _three_linear_kernel,
        out_shape=jax.ShapeDtypeStruct((rows, _LANES), jnp.float32),
        grid=grid,
        in_specs=[idx_spec, idx_spec, idx_spec,
                  smem_spec, smem_spec, smem_spec],
        out_specs=pl.BlockSpec((row_tile, _LANES), lambda r: (r, 0)),
        compiler_params=pltpu.CompilerParams(
            dimension_semantics=("parallel",),
            vmem_limit_bytes=32 * 1024 * 1024),
    )(u2, i2, v2, ut, it, dt)

    if pad:
        flat = out.reshape(-1)[:count]
        return flat.reshape(orig_shape)
    return out.reshape(orig_shape)


if __name__ == "__main__":
    key = jax.random.PRNGKey(0)
    k1, k2, k3, k4, k5, k6, k7, k8, k9 = jax.random.split(key, 9)

    n_user, n_item, n_data = 11, 13, 17

    # nn.init.kaiming_normal_(w, mode='fan_out', a=0) on an (n, 1) weight:
    # std = sqrt(2 / n); data_bias additionally scaled by 0.001.
    user_w = jax.random.normal(k1, (n_user, 1), jnp.float32) * math.sqrt(2.0 / n_user)
    item_w = jax.random.normal(k2, (n_item, 1), jnp.float32) * math.sqrt(2.0 / n_item)
    data_w = (jax.random.normal(k3, (n_data, 1), jnp.float32)
              * math.sqrt(2.0 / n_data) * 0.001)

    def reference(us, its, vs):
        return user_w[us, 0] + item_w[its, 0] + data_w[vs, 0]

    # Small batch (single block, single chunk).
    B = 8
    users = jax.random.randint(k4, (B,), 0, n_user, dtype=jnp.int32)
    items = jax.random.randint(k5, (B,), 0, n_item, dtype=jnp.int32)
    values = jax.random.randint(k6, (B,), 0, n_data, dtype=jnp.int32)
    out = jax.block_until_ready(
        three_linear_forward(users, items, values, user_w, item_w, data_w))
    ref = reference(users, items, values)
    assert out.shape == (B,), f"bad shape {out.shape}"
    assert jnp.allclose(out, ref, atol=1e-5), "mismatch vs reference (B=8)"

    # Larger ragged batch: exercises tail padding, multi-block grid with a
    # partial boundary block, and the in-kernel chunk loop.
    B2 = 3000
    users2 = jax.random.randint(k7, (B2,), 0, n_user, dtype=jnp.int32)
    items2 = jax.random.randint(k8, (B2,), 0, n_item, dtype=jnp.int32)
    values2 = jax.random.randint(k9, (B2,), 0, n_data, dtype=jnp.int32)
    out2 = jax.block_until_ready(
        three_linear_forward(users2, items2, values2, user_w, item_w, data_w))
    ref2 = reference(users2, items2, values2)
    assert out2.shape == (B2,), f"bad shape {out2.shape}"
    assert jnp.allclose(out2, ref2, atol=1e-5), "mismatch vs reference (B=3000)"

    print("KERNEL_OK")
</pallas_src>

<mosaic_0001>
module attributes {stable_mosaic.version = 11 : i64} {
  func.func @_three_linear_kernel(%arg0: i32, %arg1: memref<1x128xi32, #tpu.memory_space<vmem>>, %arg2: memref<1x128xi32, #tpu.memory_space<vmem>>, %arg3: memref<1x128xi32, #tpu.memory_space<vmem>>, %arg4: memref<11xf32, #tpu.memory_space<smem>>, %arg5: memref<13xf32, #tpu.memory_space<smem>>, %arg6: memref<17xf32, #tpu.memory_space<smem>>, %arg7: memref<1x128xf32, #tpu.memory_space<vmem>>) attributes {dimension_semantics = [#tpu.dimension_semantics<parallel>], iteration_bounds = array<i64: 1>, scalar_prefetch = 0 : i64, scratch_operands = 0 : i64, tpu.core_type = #tpu.core_type<tc>, window_params = [{transform_indices = @transform_0, window_bounds = array<i64: 1, 128>}, {transform_indices = @transform_1, window_bounds = array<i64: 1, 128>}, {transform_indices = @transform_2, window_bounds = array<i64: 1, 128>}, {transform_indices = @transform_3, window_bounds = array<i64: 11>}, {transform_indices = @transform_4, window_bounds = array<i64: 13>}, {transform_indices = @transform_5, window_bounds = array<i64: 17>}, {transform_indices = @transform_6, window_bounds = array<i64: 1, 128>}]} {
    %c0 = arith.constant 0 : index
    %c0_0 = arith.constant 0 : index
    %0 = vector.load %arg1[%c0, %c0_0] : memref<1x128xi32, #tpu.memory_space<vmem>>, vector<1x128xi32>
    %cst = arith.constant 0.000000e+00 : f32
    %1 = vector.broadcast %cst : f32 to vector<1x128xf32>
    %cst_1 = arith.constant 0.000000e+00 : f32
    %2 = vector.broadcast %cst_1 : f32 to vector<1x128xf32>
    %c0_2 = arith.constant 0 : index
    %3 = memref.load %arg4[%c0_2] : memref<11xf32, #tpu.memory_space<smem>>
    %c0_i32 = arith.constant 0 : i32
    %4 = vector.broadcast %c0_i32 : i32 to vector<1x128xi32>
    %5 = arith.cmpi eq, %0, %4 : vector<1x128xi32>
    %6 = vector.broadcast %3 : f32 to vector<1x128xf32>
    %7 = arith.select %5, %6, %1 : vector<1x128xi1>, vector<1x128xf32>
    %c1 = arith.constant 1 : index
    %8 = memref.load %arg4[%c1] : memref<11xf32, #tpu.memory_space<smem>>
    %c1_i32 = arith.constant 1 : i32
    %9 = vector.broadcast %c1_i32 : i32 to vector<1x128xi32>
    %10 = arith.cmpi eq, %0, %9 : vector<1x128xi32>
    %11 = vector.broadcast %8 : f32 to vector<1x128xf32>
    %12 = arith.select %10, %11, %2 : vector<1x128xi1>, vector<1x128xf32>
    %c2 = arith.constant 2 : index
    %13 = memref.load %arg4[%c2] : memref<11xf32, #tpu.memory_space<smem>>
    %c2_i32 = arith.constant 2 : i32
    %14 = vector.broadcast %c2_i32 : i32 to vector<1x128xi32>
    %15 = arith.cmpi eq, %0, %14 : vector<1x128xi32>
    %16 = vector.broadcast %13 : f32 to vector<1x128xf32>
    %17 = arith.select %15, %16, %7 : vector<1x128xi1>, vector<1x128xf32>
    %c3 = arith.constant 3 : index
    %18 = memref.load %arg4[%c3] : memref<11xf32, #tpu.memory_space<smem>>
    %c3_i32 = arith.constant 3 : i32
    %19 = vector.broadcast %c3_i32 : i32 to vector<1x128xi32>
    %20 = arith.cmpi eq, %0, %19 : vector<1x128xi32>
    %21 = vector.broadcast %18 : f32 to vector<1x128xf32>
    %22 = arith.select %20, %21, %12 : vector<1x128xi1>, vector<1x128xf32>
    %c4 = arith.constant 4 : index
    %23 = memref.load %arg4[%c4] : memref<11xf32, #tpu.memory_space<smem>>
    %c4_i32 = arith.constant 4 : i32
    %24 = vector.broadcast %c4_i32 : i32 to vector<1x128xi32>
    %25 = arith.cmpi eq, %0, %24 : vector<1x128xi32>
    %26 = vector.broadcast %23 : f32 to vector<1x128xf32>
    %27 = arith.select %25, %26, %17 : vector<1x128xi1>, vector<1x128xf32>
    %c5 = arith.constant 5 : index
    %28 = memref.load %arg4[%c5] : memref<11xf32, #tpu.memory_space<smem>>
    %c5_i32 = arith.constant 5 : i32
    %29 = vector.broadcast %c5_i32 : i32 to vector<1x128xi32>
    %30 = arith.cmpi eq, %0, %29 : vector<1x128xi32>
    %31 = vector.broadcast %28 : f32 to vector<1x128xf32>
    %32 = arith.select %30, %31, %22 : vector<1x128xi1>, vector<1x128xf32>
    %c6 = arith.constant 6 : index
    %33 = memref.load %arg4[%c6] : memref<11xf32, #tpu.memory_space<smem>>
    %c6_i32 = arith.constant 6 : i32
    %34 = vector.broadcast %c6_i32 : i32 to vector<1x128xi32>
    %35 = arith.cmpi eq, %0, %34 : vector<1x128xi32>
    %36 = vector.broadcast %33 : f32 to vector<1x128xf32>
    %37 = arith.select %35, %36, %27 : vector<1x128xi1>, vector<1x128xf32>
    %c7 = arith.constant 7 : index
    %38 = memref.load %arg4[%c7] : memref<11xf32, #tpu.memory_space<smem>>
    %c7_i32 = arith.constant 7 : i32
    %39 = vector.broadcast %c7_i32 : i32 to vector<1x128xi32>
    %40 = arith.cmpi eq, %0, %39 : vector<1x128xi32>
    %41 = vector.broadcast %38 : f32 to vector<1x128xf32>
    %42 = arith.select %40, %41, %32 : vector<1x128xi1>, vector<1x128xf32>
    %c8 = arith.constant 8 : index
    %43 = memref.load %arg4[%c8] : memref<11xf32, #tpu.memory_space<smem>>
    %c8_i32 = arith.constant 8 : i32
    %44 = vector.broadcast %c8_i32 : i32 to vector<1x128xi32>
    %45 = arith.cmpi eq, %0, %44 : vector<1x128xi32>
    %46 = vector.broadcast %43 : f32 to vector<1x128xf32>
    %47 = arith.select %45, %46, %37 : vector<1x128xi1>, vector<1x128xf32>
    %c9 = arith.constant 9 : index
    %48 = memref.load %arg4[%c9] : memref<11xf32, #tpu.memory_space<smem>>
    %c9_i32 = arith.constant 9 : i32
    %49 = vector.broadcast %c9_i32 : i32 to vector<1x128xi32>
    %50 = arith.cmpi eq, %0, %49 : vector<1x128xi32>
    %51 = vector.broadcast %48 : f32 to vector<1x128xf32>
    %52 = arith.select %50, %51, %42 : vector<1x128xi1>, vector<1x128xf32>
    %c10 = arith.constant 10 : index
    %53 = memref.load %arg4[%c10] : memref<11xf32, #tpu.memory_space<smem>>
    %c10_i32 = arith.constant 10 : i32
    %54 = vector.broadcast %c10_i32 : i32 to vector<1x128xi32>
    %55 = arith.cmpi eq, %0, %54 : vector<1x128xi32>
    %56 = vector.broadcast %53 : f32 to vector<1x128xf32>
    %57 = arith.select %55, %56, %47 : vector<1x128xi1>, vector<1x128xf32>
    %c0_3 = arith.constant 0 : index
    %c0_4 = arith.constant 0 : index
    %58 = vector.load %arg2[%c0_3, %c0_4] : memref<1x128xi32, #tpu.memory_space<vmem>>, vector<1x128xi32>
    %cst_5 = arith.constant 0.000000e+00 : f32
    %59 = vector.broadcast %cst_5 : f32 to vector<1x128xf32>
    %cst_6 = arith.constant 0.000000e+00 : f32
    %60 = vector.broadcast %cst_6 : f32 to vector<1x128xf32>
    %c0_7 = arith.constant 0 : index
    %61 = memref.load %arg5[%c0_7] : memref<13xf32, #tpu.memory_space<smem>>
    %c0_i32_8 = arith.constant 0 : i32
    %62 = vector.broadcast %c0_i32_8 : i32 to vector<1x128xi32>
    %63 = arith.cmpi eq, %58, %62 : vector<1x128xi32>
    %64 = vector.broadcast %61 : f32 to vector<1x128xf32>
    %65 = arith.select %63, %64, %59 : vector<1x128xi1>, vector<1x128xf32>
    %c1_9 = arith.constant 1 : index
    %66 = memref.load %arg5[%c1_9] : memref<13xf32, #tpu.memory_space<smem>>
    %c1_i32_10 = arith.constant 1 : i32
    %67 = vector.broadcast %c1_i32_10 : i32 to vector<1x128xi32>
    %68 = arith.cmpi eq, %58, %67 : vector<1x128xi32>
    %69 = vector.broadcast %66 : f32 to vector<1x128xf32>
    %70 = arith.select %68, %69, %60 : vector<1x128xi1>, vector<1x128xf32>
    %c2_11 = arith.constant 2 : index
    %71 = memref.load %arg5[%c2_11] : memref<13xf32, #tpu.memory_space<smem>>
    %c2_i32_12 = arith.constant 2 : i32
    %72 = vector.broadcast %c2_i32_12 : i32 to vector<1x128xi32>
    %73 = arith.cmpi eq, %58, %72 : vector<1x128xi32>
    %74 = vector.broadcast %71 : f32 to vector<1x128xf32>
    %75 = arith.select %73, %74, %65 : vector<1x128xi1>, vector<1x128xf32>
    %c3_13 = arith.constant 3 : index
    %76 = memref.load %arg5[%c3_13] : memref<13xf32, #tpu.memory_space<smem>>
    %c3_i32_14 = arith.constant 3 : i32
    %77 = vector.broadcast %c3_i32_14 : i32 to vector<1x128xi32>
    %78 = arith.cmpi eq, %58, %77 : vector<1x128xi32>
    %79 = vector.broadcast %76 : f32 to vector<1x128xf32>
    %80 = arith.select %78, %79, %70 : vector<1x128xi1>, vector<1x128xf32>
    %c4_15 = arith.constant 4 : index
    %81 = memref.load %arg5[%c4_15] : memref<13xf32, #tpu.memory_space<smem>>
    %c4_i32_16 = arith.constant 4 : i32
    %82 = vector.broadcast %c4_i32_16 : i32 to vector<1x128xi32>
    %83 = arith.cmpi eq, %58, %82 : vector<1x128xi32>
    %84 = vector.broadcast %81 : f32 to vector<1x128xf32>
    %85 = arith.select %83, %84, %75 : vector<1x128xi1>, vector<1x128xf32>
    %c5_17 = arith.constant 5 : index
    %86 = memref.load %arg5[%c5_17] : memref<13xf32, #tpu.memory_space<smem>>
    %c5_i32_18 = arith.constant 5 : i32
    %87 = vector.broadcast %c5_i32_18 : i32 to vector<1x128xi32>
    %88 = arith.cmpi eq, %58, %87 : vector<1x128xi32>
    %89 = vector.broadcast %86 : f32 to vector<1x128xf32>
    %90 = arith.select %88, %89, %80 : vector<1x128xi1>, vector<1x128xf32>
    %c6_19 = arith.constant 6 : index
    %91 = memref.load %arg5[%c6_19] : memref<13xf32, #tpu.memory_space<smem>>
    %c6_i32_20 = arith.constant 6 : i32
    %92 = vector.broadcast %c6_i32_20 : i32 to vector<1x128xi32>
    %93 = arith.cmpi eq, %58, %92 : vector<1x128xi32>
    %94 = vector.broadcast %91 : f32 to vector<1x128xf32>
    %95 = arith.select %93, %94, %85 : vector<1x128xi1>, vector<1x128xf32>
    %c7_21 = arith.constant 7 : index
    %96 = memref.load %arg5[%c7_21] : memref<13xf32, #tpu.memory_space<smem>>
    %c7_i32_22 = arith.constant 7 : i32
    %97 = vector.broadcast %c7_i32_22 : i32 to vector<1x128xi32>
    %98 = arith.cmpi eq, %58, %97 : vector<1x128xi32>
    %99 = vector.broadcast %96 : f32 to vector<1x128xf32>
    %100 = arith.select %98, %99, %90 : vector<1x128xi1>, vector<1x128xf32>
    %c8_23 = arith.constant 8 : index
    %101 = memref.load %arg5[%c8_23] : memref<13xf32, #tpu.memory_space<smem>>
    %c8_i32_24 = arith.constant 8 : i32
    %102 = vector.broadcast %c8_i32_24 : i32 to vector<1x128xi32>
    %103 = arith.cmpi eq, %58, %102 : vector<1x128xi32>
    %104 = vector.broadcast %101 : f32 to vector<1x128xf32>
    %105 = arith.select %103, %104, %95 : vector<1x128xi1>, vector<1x128xf32>
    %c9_25 = arith.constant 9 : index
    %106 = memref.load %arg5[%c9_25] : memref<13xf32, #tpu.memory_space<smem>>
    %c9_i32_26 = arith.constant 9 : i32
    %107 = vector.broadcast %c9_i32_26 : i32 to vector<1x128xi32>
    %108 = arith.cmpi eq, %58, %107 : vector<1x128xi32>
    %109 = vector.broadcast %106 : f32 to vector<1x128xf32>
    %110 = arith.select %108, %109, %100 : vector<1x128xi1>, vector<1x128xf32>
    %c10_27 = arith.constant 10 : index
    %111 = memref.load %arg5[%c10_27] : memref<13xf32, #tpu.memory_space<smem>>
    %c10_i32_28 = arith.constant 10 : i32
    %112 = vector.broadcast %c10_i32_28 : i32 to vector<1x128xi32>
    %113 = arith.cmpi eq, %58, %112 : vector<1x128xi32>
    %114 = vector.broadcast %111 : f32 to vector<1x128xf32>
    %115 = arith.select %113, %114, %105 : vector<1x128xi1>, vector<1x128xf32>
    %c11 = arith.constant 11 : index
    %116 = memref.load %arg5[%c11] : memref<13xf32, #tpu.memory_space<smem>>
    %c11_i32 = arith.constant 11 : i32
    %117 = vector.broadcast %c11_i32 : i32 to vector<1x128xi32>
    %118 = arith.cmpi eq, %58, %117 : vector<1x128xi32>
    %119 = vector.broadcast %116 : f32 to vector<1x128xf32>
    %120 = arith.select %118, %119, %110 : vector<1x128xi1>, vector<1x128xf32>
    %c12 = arith.constant 12 : index
    %121 = memref.load %arg5[%c12] : memref<13xf32, #tpu.memory_space<smem>>
    %c12_i32 = arith.constant 12 : i32
    %122 = vector.broadcast %c12_i32 : i32 to vector<1x128xi32>
    %123 = arith.cmpi eq, %58, %122 : vector<1x128xi32>
    %124 = vector.broadcast %121 : f32 to vector<1x128xf32>
    %125 = arith.select %123, %124, %115 : vector<1x128xi1>, vector<1x128xf32>
    %c0_29 = arith.constant 0 : index
    %c0_30 = arith.constant 0 : index
    %126 = vector.load %arg3[%c0_29, %c0_30] : memref<1x128xi32, #tpu.memory_space<vmem>>, vector<1x128xi32>
    %cst_31 = arith.constant 0.000000e+00 : f32
    %127 = vector.broadcast %cst_31 : f32 to vector<1x128xf32>
    %cst_32 = arith.constant 0.000000e+00 : f32
    %128 = vector.broadcast %cst_32 : f32 to vector<1x128xf32>
    %c0_33 = arith.constant 0 : index
    %129 = memref.load %arg6[%c0_33] : memref<17xf32, #tpu.memory_space<smem>>
    %c0_i32_34 = arith.constant 0 : i32
    %130 = vector.broadcast %c0_i32_34 : i32 to vector<1x128xi32>
    %131 = arith.cmpi eq, %126, %130 : vector<1x128xi32>
    %132 = vector.broadcast %129 : f32 to vector<1x128xf32>
    %133 = arith.select %131, %132, %127 : vector<1x128xi1>, vector<1x128xf32>
    %c1_35 = arith.constant 1 : index
    %134 = memref.load %arg6[%c1_35] : memref<17xf32, #tpu.memory_space<smem>>
    %c1_i32_36 = arith.constant 1 : i32
    %135 = vector.broadcast %c1_i32_36 : i32 to vector<1x128xi32>
    %136 = arith.cmpi eq, %126, %135 : vector<1x128xi32>
    %137 = vector.broadcast %134 : f32 to vector<1x128xf32>
    %138 = arith.select %136, %137, %128 : vector<1x128xi1>, vector<1x128xf32>
    %c2_37 = arith.constant 2 : index
    %139 = memref.load %arg6[%c2_37] : memref<17xf32, #tpu.memory_space<smem>>
    %c2_i32_38 = arith.constant 2 : i32
    %140 = vector.broadcast %c2_i32_38 : i32 to vector<1x128xi32>
    %141 = arith.cmpi eq, %126, %140 : vector<1x128xi32>
    %142 = vector.broadcast %139 : f32 to vector<1x128xf32>
    %143 = arith.select %141, %142, %133 : vector<1x128xi1>, vector<1x128xf32>
    %c3_39 = arith.constant 3 : index
    %144 = memref.load %arg6[%c3_39] : memref<17xf32, #tpu.memory_space<smem>>
    %c3_i32_40 = arith.constant 3 : i32
    %145 = vector.broadcast %c3_i32_40 : i32 to vector<1x128xi32>
    %146 = arith.cmpi eq, %126, %145 : vector<1x128xi32>
    %147 = vector.broadcast %144 : f32 to vector<1x128xf32>
    %148 = arith.select %146, %147, %138 : vector<1x128xi1>, vector<1x128xf32>
    %c4_41 = arith.constant 4 : index
    %149 = memref.load %arg6[%c4_41] : memref<17xf32, #tpu.memory_space<smem>>
    %c4_i32_42 = arith.constant 4 : i32
    %150 = vector.broadcast %c4_i32_42 : i32 to vector<1x128xi32>
    %151 = arith.cmpi eq, %126, %150 : vector<1x128xi32>
    %152 = vector.broadcast %149 : f32 to vector<1x128xf32>
    %153 = arith.select %151, %152, %143 : vector<1x128xi1>, vector<1x128xf32>
    %c5_43 = arith.constant 5 : index
    %154 = memref.load %arg6[%c5_43] : memref<17xf32, #tpu.memory_space<smem>>
    %c5_i32_44 = arith.constant 5 : i32
    %155 = vector.broadcast %c5_i32_44 : i32 to vector<1x128xi32>
    %156 = arith.cmpi eq, %126, %155 : vector<1x128xi32>
    %157 = vector.broadcast %154 : f32 to vector<1x128xf32>
    %158 = arith.select %156, %157, %148 : vector<1x128xi1>, vector<1x128xf32>
    %c6_45 = arith.constant 6 : index
    %159 = memref.load %arg6[%c6_45] : memref<17xf32, #tpu.memory_space<smem>>
    %c6_i32_46 = arith.constant 6 : i32
    %160 = vector.broadcast %c6_i32_46 : i32 to vector<1x128xi32>
    %161 = arith.cmpi eq, %126, %160 : vector<1x128xi32>
    %162 = vector.broadcast %159 : f32 to vector<1x128xf32>
    %163 = arith.select %161, %162, %153 : vector<1x128xi1>, vector<1x128xf32>
    %c7_47 = arith.constant 7 : index
    %164 = memref.load %arg6[%c7_47] : memref<17xf32, #tpu.memory_space<smem>>
    %c7_i32_48 = arith.constant 7 : i32
    %165 = vector.broadcast %c7_i32_48 : i32 to vector<1x128xi32>
    %166 = arith.cmpi eq, %126, %165 : vector<1x128xi32>
    %167 = vector.broadcast %164 : f32 to vector<1x128xf32>
    %168 = arith.select %166, %167, %158 : vector<1x128xi1>, vector<1x128xf32>
    %c8_49 = arith.constant 8 : index
    %169 = memref.load %arg6[%c8_49] : memref<17xf32, #tpu.memory_space<smem>>
    %c8_i32_50 = arith.constant 8 : i32
    %170 = vector.broadcast %c8_i32_50 : i32 to vector<1x128xi32>
    %171 = arith.cmpi eq, %126, %170 : vector<1x128xi32>
    %172 = vector.broadcast %169 : f32 to vector<1x128xf32>
    %173 = arith.select %171, %172, %163 : vector<1x128xi1>, vector<1x128xf32>
    %c9_51 = arith.constant 9 : index
    %174 = memref.load %arg6[%c9_51] : memref<17xf32, #tpu.memory_space<smem>>
    %c9_i32_52 = arith.constant 9 : i32
    %175 = vector.broadcast %c9_i32_52 : i32 to vector<1x128xi32>
    %176 = arith.cmpi eq, %126, %175 : vector<1x128xi32>
    %177 = vector.broadcast %174 : f32 to vector<1x128xf32>
    %178 = arith.select %176, %177, %168 : vector<1x128xi1>, vector<1x128xf32>
    %c10_53 = arith.constant 10 : index
    %179 = memref.load %arg6[%c10_53] : memref<17xf32, #tpu.memory_space<smem>>
    %c10_i32_54 = arith.constant 10 : i32
    %180 = vector.broadcast %c10_i32_54 : i32 to vector<1x128xi32>
    %181 = arith.cmpi eq, %126, %180 : vector<1x128xi32>
    %182 = vector.broadcast %179 : f32 to vector<1x128xf32>
    %183 = arith.select %181, %182, %173 : vector<1x128xi1>, vector<1x128xf32>
    %c11_55 = arith.constant 11 : index
    %184 = memref.load %arg6[%c11_55] : memref<17xf32, #tpu.memory_space<smem>>
    %c11_i32_56 = arith.constant 11 : i32
    %185 = vector.broadcast %c11_i32_56 : i32 to vector<1x128xi32>
    %186 = arith.cmpi eq, %126, %185 : vector<1x128xi32>
    %187 = vector.broadcast %184 : f32 to vector<1x128xf32>
    %188 = arith.select %186, %187, %178 : vector<1x128xi1>, vector<1x128xf32>
    %c12_57 = arith.constant 12 : index
    %189 = memref.load %arg6[%c12_57] : memref<17xf32, #tpu.memory_space<smem>>
    %c12_i32_58 = arith.constant 12 : i32
    %190 = vector.broadcast %c12_i32_58 : i32 to vector<1x128xi32>
    %191 = arith.cmpi eq, %126, %190 : vector<1x128xi32>
    %192 = vector.broadcast %189 : f32 to vector<1x128xf32>
    %193 = arith.select %191, %192, %183 : vector<1x128xi1>, vector<1x128xf32>
    %c13 = arith.constant 13 : index
    %194 = memref.load %arg6[%c13] : memref<17xf32, #tpu.memory_space<smem>>
    %c13_i32 = arith.constant 13 : i32
    %195 = vector.broadcast %c13_i32 : i32 to vector<1x128xi32>
    %196 = arith.cmpi eq, %126, %195 : vector<1x128xi32>
    %197 = vector.broadcast %194 : f32 to vector<1x128xf32>
    %198 = arith.select %196, %197, %188 : vector<1x128xi1>, vector<1x128xf32>
    %c14 = arith.constant 14 : index
    %199 = memref.load %arg6[%c14] : memref<17xf32, #tpu.memory_space<smem>>
    %c14_i32 = arith.constant 14 : i32
    %200 = vector.broadcast %c14_i32 : i32 to vector<1x128xi32>
    %201 = arith.cmpi eq, %126, %200 : vector<1x128xi32>
    %202 = vector.broadcast %199 : f32 to vector<1x128xf32>
    %203 = arith.select %201, %202, %193 : vector<1x128xi1>, vector<1x128xf32>
    %c15 = arith.constant 15 : index
    %204 = memref.load %arg6[%c15] : memref<17xf32, #tpu.memory_space<smem>>
    %c15_i32 = arith.constant 15 : i32
    %205 = vector.broadcast %c15_i32 : i32 to vector<1x128xi32>
    %206 = arith.cmpi eq, %126, %205 : vector<1x128xi32>
    %207 = vector.broadcast %204 : f32 to vector<1x128xf32>
    %208 = arith.select %206, %207, %198 : vector<1x128xi1>, vector<1x128xf32>
    %c16 = arith.constant 16 : index
    %209 = memref.load %arg6[%c16] : memref<17xf32, #tpu.memory_space<smem>>
    %c16_i32 = arith.constant 16 : i32
    %210 = vector.broadcast %c16_i32 : i32 to vector<1x128xi32>
    %211 = arith.cmpi eq, %126, %210 : vector<1x128xi32>
    %212 = vector.broadcast %209 : f32 to vector<1x128xf32>
    %213 = arith.select %211, %212, %203 : vector<1x128xi1>, vector<1x128xf32>
    %214 = arith.addf %57, %52 : vector<1x128xf32>
    %215 = arith.addf %125, %120 : vector<1x128xf32>
    %216 = arith.addf %213, %208 : vector<1x128xf32>
    %217 = arith.addf %214, %215 : vector<1x128xf32>
    %218 = arith.addf %217, %216 : vector<1x128xf32>
    %c0_59 = arith.constant 0 : index
    %c0_60 = arith.constant 0 : index
    %219 = vector.load %arg7[%c0_59, %c0_60] : memref<1x128xf32, #tpu.memory_space<vmem>>, vector<1x128xf32>
    tpu.vector_store %arg7[%c0_59, %c0_60], %218 {strides = array<i32>} : memref<1x128xf32, #tpu.memory_space<vmem>>, vector<1x128xf32>,
    return
  }
  func.func @transform_0(%arg0: i32) -> (i32, i32) {
    %c0_i32 = arith.constant 0 : i32
    %c0_i32_0 = arith.constant 0 : i32
    return %arg0, %c0_i32 : i32, i32
  }
  func.func @transform_1(%arg0: i32) -> (i32, i32) {
    %c0_i32 = arith.constant 0 : i32
    %c0_i32_0 = arith.constant 0 : i32
    return %arg0, %c0_i32 : i32, i32
  }
  func.func @transform_2(%arg0: i32) -> (i32, i32) {
    %c0_i32 = arith.constant 0 : i32
    %c0_i32_0 = arith.constant 0 : i32
    return %arg0, %c0_i32 : i32, i32
  }
  func.func @transform_3(%arg0: i32) -> i32 {
    %c0_i32 = arith.constant 0 : i32
    %c0_i32_0 = arith.constant 0 : i32
    return %c0_i32 : i32
  }
  func.func @transform_4(%arg0: i32) -> i32 {
    %c0_i32 = arith.constant 0 : i32
    %c0_i32_0 = arith.constant 0 : i32
    return %c0_i32 : i32
  }
  func.func @transform_5(%arg0: i32) -> i32 {
    %c0_i32 = arith.constant 0 : i32
    %c0_i32_0 = arith.constant 0 : i32
    return %c0_i32 : i32
  }
  func.func @transform_6(%arg0: i32) -> (i32, i32) {
    %c0_i32 = arith.constant 0 : i32
    %c0_i32_0 = arith.constant 0 : i32
    return %arg0, %c0_i32 : i32, i32
  }
}

</mosaic_0001>

<llo_original>
// kernel: tpu_custom_call.1
$region0: #{tpu_custom_call.1}
  #allocation0 [shape = 'u32[]', space=smem, size = 0x4, offset = 0x4, fixed_abs, tag = 'smem constant byte address 0x4 - core index']
  #allocation1 [shape = 'u32[144,128]{1,0:T(1,128)}', space=vmem, size = 0x12000, scoped, tag = 'internal scratch']
  %s0 = inlined_call_operand.hbm [shape: s32[1,128], index: 0, kind: input, shape index: {}]
  %s1 = inlined_call_operand.vmem [shape: s32[1,128], index: 1, kind: input, shape index: {}]
  %s2 = inlined_call_operand.vmem [shape: s32[1,128], index: 2, kind: input, shape index: {}]
  %s3 = inlined_call_operand.vmem [shape: f32[11], index: 3, kind: input, shape index: {}]
  %s4 = inlined_call_operand.vmem [shape: f32[13], index: 4, kind: input, shape index: {}]
  %s5 = inlined_call_operand.vmem [shape: f32[17], index: 5, kind: input, shape index: {}]
  %s6 = inlined_call_operand.hbm [shape: f32[1,128], index: 6, kind: output, shape index: {}]
  %s7 = sld [smem:[#allocation0]]
  $region50: #{tpu_custom_call.1} parent=0
    _
  %s9 = ssub.s32 1, %s7
  %s10 = scalar_select 0, %s9, %s7
  $region1: #{tpu_custom_call.1} parent=0
    #allocation2 [shape = 'u8[512]{0}', space=vmem, size = 0x400, scoped, tag = 'input window, operand 0, single buffered']
    #allocation3 [shape = 's32[1]{0}', space=sflag, size = 0x4, scoped, tag = 'scoped memory for tpu_custom_call.1']
    #allocation4 [shape = 's32[1]{0}', space=sflag, size = 0x4, scoped, tag = 'scoped memory for tpu_custom_call.1']
    #allocation5 [shape = 's32[1]{0}', space=sflag, size = 0x4, scoped, tag = 'scoped memory for tpu_custom_call.1']
    #allocation6 [shape = 'u8[512]{0}', space=smem, size = 0x200, scoped, tag = 'input window, operand 3, single buffered']
    #allocation7 [shape = 'u8[512]{0}', space=smem, size = 0x200, scoped, tag = 'input window, operand 4, single buffered']
    #allocation8 [shape = 's32[1]{0}', space=sflag, size = 0x4, scoped, tag = 'scoped memory for tpu_custom_call.1']
    #allocation9 [shape = 'u8[512]{0}', space=smem, size = 0x200, scoped, tag = 'input window, operand 5, single buffered']
    #allocation10 [shape = 'u8[512]{0}', space=vmem, size = 0x400, scoped, tag = 'output window, operand 0, single buffered']
    %11 = vsyncpa [#allocation3], 0
    %12 = vsyncpa [#allocation5], 0
    %13 = vsyncpa [#allocation8], 0
    %14 = vsyncpa [#allocation4], 0
    // Predicated region
    $region2: #{tpu_custom_call.1} parent=1 // pred_check
      _
    $region3: #{tpu_custom_call.1} parent=1 // pred_check_branch
      %16 = sbr.rel (0) target = $region5
    $region4: #{tpu_custom_call.1} parent=1 // pred_region
      %s18 = ssub.s32 16, 16
      %19 = vsyncadd [#allocation3], %s18
      %s21 = sshll.u32 [#allocation2], 4
      %s22 = int_to_ptr.vmem [resolvable:$true] %s21
      %24 = dma.hbm_to_vmem [thread:$0]  %s0, 16, %s22, [#allocation3]
    $region5: #{tpu_custom_call.1} parent=1 // pred_fallthru
      _
    // Predicated region
    $region6: #{tpu_custom_call.1} parent=1 // pred_check
      _
    $region7: #{tpu_custom_call.1} parent=1 // pred_check_branch
      %26 = sbr.rel (0) target = $region9
    $region8: #{tpu_custom_call.1} parent=1 // pred_region
      _
    $region9: #{tpu_custom_call.1} parent=1 // pred_fallthru
      _
    // Predicated region
    $region10: #{tpu_custom_call.1} parent=1 // pred_check
      _
    $region11: #{tpu_custom_call.1} parent=1 // pred_check_branch
      %28 = sbr.rel (0) target = $region13
    $region12: #{tpu_custom_call.1} parent=1 // pred_region
      _
    $region13: #{tpu_custom_call.1} parent=1 // pred_fallthru
      _
    // Predicated region
    $region14: #{tpu_custom_call.1} parent=1 // pred_check
      _
    $region15: #{tpu_custom_call.1} parent=1 // pred_check_branch
      %30 = sbr.rel (0) target = $region17
    $region16: #{tpu_custom_call.1} parent=1 // pred_region
      %s32 = ssub.s32 16, 16
      %33 = vsyncadd [#allocation5], %s32
      %s35 = sshll.u32 %s3, 4
      %s36 = int_to_ptr.vmem [resolvable:$true] %s35
      %38 = dma.vmem_to_smem %s36, 16, [#allocation6], [#allocation5]
    $region17: #{tpu_custom_call.1} parent=1 // pred_fallthru
      _
    // Predicated region
    $region18: #{tpu_custom_call.1} parent=1 // pred_check
      _
    $region19: #{tpu_custom_call.1} parent=1 // pred_check_branch
      %40 = sbr.rel (0) target = $region21
    $region20: #{tpu_custom_call.1} parent=1 // pred_region
      %s42 = ssub.s32 16, 16
      %43 = vsyncadd [#allocation8], %s42
      %s45 = sshll.u32 %s4, 4
      %s46 = int_to_ptr.vmem [resolvable:$true] %s45
      %48 = dma.vmem_to_smem %s46, 16, [#allocation7], [#allocation8]
    $region21: #{tpu_custom_call.1} parent=1 // pred_fallthru
      _
    // Predicated region
    $region22: #{tpu_custom_call.1} parent=1 // pred_check
      _
    $region23: #{tpu_custom_call.1} parent=1 // pred_check_branch
      %50 = sbr.rel (0) target = $region25
    $region24: #{tpu_custom_call.1} parent=1 // pred_region
      %s52 = ssub.s32 16, 16
      %53 = vsyncadd [#allocation8], %s52
      %s55 = sshll.u32 %s5, 4
      %s56 = int_to_ptr.vmem [resolvable:$true] %s55
      %58 = dma.vmem_to_smem %s56, 16, [#allocation9], [#allocation8]
    $region25: #{tpu_custom_call.1} parent=1 // pred_fallthru
      _
    // Predicated region
    $region26: #{tpu_custom_call.1} parent=1 // pred_check
      _
    $region27: #{tpu_custom_call.1} parent=1 // pred_check_branch
      %60 = sbr.rel (0) target = $region29
    $region28: #{tpu_custom_call.1} parent=1 // pred_region
      %61 = dma.done [#allocation3], 16
    $region29: #{tpu_custom_call.1} parent=1 // pred_fallthru
      _
    // Predicated region
    $region30: #{tpu_custom_call.1} parent=1 // pred_check
      _
    $region31: #{tpu_custom_call.1} parent=1 // pred_check_branch
      %63 = sbr.rel (0) target = $region33
    $region32: #{tpu_custom_call.1} parent=1 // pred_region
      %64 = dma.done [#allocation5], 16
    $region33: #{tpu_custom_call.1} parent=1 // pred_fallthru
      _
    // Predicated region
    $region34: #{tpu_custom_call.1} parent=1 // pred_check
      _
    $region35: #{tpu_custom_call.1} parent=1 // pred_check_branch
      %66 = sbr.rel (0) target = $region37
    $region36: #{tpu_custom_call.1} parent=1 // pred_region
      %67 = dma.done [#allocation8], 16
    $region37: #{tpu_custom_call.1} parent=1 // pred_fallthru
      _
    // Predicated region
    $region38: #{tpu_custom_call.1} parent=1 // pred_check
      _
    $region39: #{tpu_custom_call.1} parent=1 // pred_check_branch
      %69 = sbr.rel (0) target = $region41
    $region40: #{tpu_custom_call.1} parent=1 // pred_region
      %70 = dma.done [#allocation8], 16
    $region41: #{tpu_custom_call.1} parent=1 // pred_fallthru
      _
    %71 = sfence
    %v72 = vld [vmem:[#allocation2] sm:$0x1]
    %s73 = sld [smem:[#allocation6]]
    %vm74 = vcmp.eq.s32.totalorder %v72, 0
    %v75 = vstv %s73
    %v76 = vsel %vm74, %v75, 0.0
    %s77 = sld [smem:[#allocation6 + $0x1]]
    %vm78 = vcmp.eq.s32.totalorder %v72, 1
    %v79 = vstv %s77
    %v80 = vsel %vm78, %v79, 0.0
    %s81 = sld [smem:[#allocation6 + $0x2]]
    %vm82 = vcmp.eq.s32.totalorder %v72, 2
    %v83 = vstv %s81
    %v84 = vsel %vm82, %v83, %v76
    %s85 = sld [smem:[#allocation6 + $0x3]]
    %vm86 = vcmp.eq.s32.totalorder %v72, 3
    %v87 = vstv %s85
    %v88 = vsel %vm86, %v87, %v80
    %s89 = sld [smem:[#allocation6 + $0x4]]
    %vm90 = vcmp.eq.s32.totalorder %v72, 4
    %v91 = vstv %s89
    %v92 = vsel %vm90, %v91, %v84
    %s93 = sld [smem:[#allocation6 + $0x5]]
    %vm94 = vcmp.eq.s32.totalorder %v72, 5
    %v95 = vstv %s93
    %v96 = vsel %vm94, %v95, %v88
    %s97 = sld [smem:[#allocation6 + $0x6]]
    %vm98 = vcmp.eq.s32.totalorder %v72, 6
    %v99 = vstv %s97
    %v100 = vsel %vm98, %v99, %v92
    %s101 = sld [smem:[#allocation6 + $0x7]]
    %vm102 = vcmp.eq.s32.totalorder %v72, 7
    %v103 = vstv %s101
    %v104 = vsel %vm102, %v103, %v96
    %s105 = sld [smem:[#allocation6 + $0x8]]
    %vm106 = vcmp.eq.s32.totalorder %v72, 8
    %v107 = vstv %s105
    %v108 = vsel %vm106, %v107, %v100
    %s109 = sld [smem:[#allocation6 + $0x9]]
    %vm110 = vcmp.eq.s32.totalorder %v72, 9
    %v111 = vstv %s109
    %v112 = vsel %vm110, %v111, %v104
    %s113 = sld [smem:[#allocation6 + $0xa]]
    %vm114 = vcmp.eq.s32.totalorder %v72, 10
    %v115 = vstv %s113
    %v116 = vsel %vm114, %v115, %v108
    %v117 = vld [vmem:[%s1] sm:$0x1]
    %s118 = sld [smem:[#allocation7]]
    %vm119 = vcmp.eq.s32.totalorder %v117, 0
    %v120 = vstv %s118
    %v121 = vsel %vm119, %v120, 0.0
    %s122 = sld [smem:[#allocation7 + $0x1]]
    %vm123 = vcmp.eq.s32.totalorder %v117, 1
    %v124 = vstv %s122
    %v125 = vsel %vm123, %v124, 0.0
    %s126 = sld [smem:[#allocation7 + $0x2]]
    %vm127 = vcmp.eq.s32.totalorder %v117, 2
    %v128 = vstv %s126
    %v129 = vsel %vm127, %v128, %v121
    %s130 = sld [smem:[#allocation7 + $0x3]]
    %vm131 = vcmp.eq.s32.totalorder %v117, 3
    %v132 = vstv %s130
    %v133 = vsel %vm131, %v132, %v125
    %s134 = sld [smem:[#allocation7 + $0x4]]
    %vm135 = vcmp.eq.s32.totalorder %v117, 4
    %v136 = vstv %s134
    %v137 = vsel %vm135, %v136, %v129
    %s138 = sld [smem:[#allocation7 + $0x5]]
    %vm139 = vcmp.eq.s32.totalorder %v117, 5
    %v140 = vstv %s138
    %v141 = vsel %vm139, %v140, %v133
    %s142 = sld [smem:[#allocation7 + $0x6]]
    %vm143 = vcmp.eq.s32.totalorder %v117, 6
    %v144 = vstv %s142
    %v145 = vsel %vm143, %v144, %v137
    %s146 = sld [smem:[#allocation7 + $0x7]]
    %vm147 = vcmp.eq.s32.totalorder %v117, 7
    %v148 = vstv %s146
    %v149 = vsel %vm147, %v148, %v141
    %s150 = sld [smem:[#allocation7 + $0x8]]
    %vm151 = vcmp.eq.s32.totalorder %v117, 8
    %v152 = vstv %s150
    %v153 = vsel %vm151, %v152, %v145
    %s154 = sld [smem:[#allocation7 + $0x9]]
    %vm155 = vcmp.eq.s32.totalorder %v117, 9
    %v156 = vstv %s154
    %v157 = vsel %vm155, %v156, %v149
    %s158 = sld [smem:[#allocation7 + $0xa]]
    %vm159 = vcmp.eq.s32.totalorder %v117, 10
    %v160 = vstv %s158
    %v161 = vsel %vm159, %v160, %v153
    %s162 = sld [smem:[#allocation7 + $0xb]]
    %vm163 = vcmp.eq.s32.totalorder %v117, 11
    %v164 = vstv %s162
    %v165 = vsel %vm163, %v164, %v157
    %s166 = sld [smem:[#allocation7 + $0xc]]
    %vm167 = vcmp.eq.s32.totalorder %v117, 12
    %v168 = vstv %s166
    %v169 = vsel %vm167, %v168, %v161
    %v170 = vld [vmem:[%s2] sm:$0x1]
    %s171 = sld [smem:[#allocation9]]
    %vm172 = vcmp.eq.s32.totalorder %v170, 0
    %v173 = vstv %s171
    %v174 = vsel %vm172, %v173, 0.0
    %s175 = sld [smem:[#allocation9 + $0x1]]
    %vm176 = vcmp.eq.s32.totalorder %v170, 1
    %v177 = vstv %s175
    %v178 = vsel %vm176, %v177, 0.0
    %s179 = sld [smem:[#allocation9 + $0x2]]
    %vm180 = vcmp.eq.s32.totalorder %v170, 2
    %v181 = vstv %s179
    %v182 = vsel %vm180, %v181, %v174
    %s183 = sld [smem:[#allocation9 + $0x3]]
    %vm184 = vcmp.eq.s32.totalorder %v170, 3
    %v185 = vstv %s183
    %v186 = vsel %vm184, %v185, %v178
    %s187 = sld [smem:[#allocation9 + $0x4]]
    %vm188 = vcmp.eq.s32.totalorder %v170, 4
    %v189 = vstv %s187
    %v190 = vsel %vm188, %v189, %v182
    %s191 = sld [smem:[#allocation9 + $0x5]]
    %vm192 = vcmp.eq.s32.totalorder %v170, 5
    %v193 = vstv %s191
    %v194 = vsel %vm192, %v193, %v186
    %s195 = sld [smem:[#allocation9 + $0x6]]
    %vm196 = vcmp.eq.s32.totalorder %v170, 6
    %v197 = vstv %s195
    %v198 = vsel %vm196, %v197, %v190
    %s199 = sld [smem:[#allocation9 + $0x7]]
    %vm200 = vcmp.eq.s32.totalorder %v170, 7
    %v201 = vstv %s199
    %v202 = vsel %vm200, %v201, %v194
    %s203 = sld [smem:[#allocation9 + $0x8]]
    %vm204 = vcmp.eq.s32.totalorder %v170, 8
    %v205 = vstv %s203
    %v206 = vsel %vm204, %v205, %v198
    %s207 = sld [smem:[#allocation9 + $0x9]]
    %vm208 = vcmp.eq.s32.totalorder %v170, 9
    %v209 = vstv %s207
    %v210 = vsel %vm208, %v209, %v202
    %s211 = sld [smem:[#allocation9 + $0xa]]
    %vm212 = vcmp.eq.s32.totalorder %v170, 10
    %v213 = vstv %s211
    %v214 = vsel %vm212, %v213, %v206
    %s215 = sld [smem:[#allocation9 + $0xb]]
    %vm216 = vcmp.eq.s32.totalorder %v170, 11
    %v217 = vstv %s215
    %v218 = vsel %vm216, %v217, %v210
    %s219 = sld [smem:[#allocation9 + $0xc]]
    %vm220 = vcmp.eq.s32.totalorder %v170, 12
    %v221 = vstv %s219
    %v222 = vsel %vm220, %v221, %v214
    %s223 = sld [smem:[#allocation9 + $0xd]]
    %vm224 = vcmp.eq.s32.totalorder %v170, 13
    %v225 = vstv %s223
    %v226 = vsel %vm224, %v225, %v218
    %s227 = sld [smem:[#allocation9 + $0xe]]
    %vm228 = vcmp.eq.s32.totalorder %v170, 14
    %v229 = vstv %s227
    %v230 = vsel %vm228, %v229, %v222
    %s231 = sld [smem:[#allocation9 + $0xf]]
    %vm232 = vcmp.eq.s32.totalorder %v170, 15
    %v233 = vstv %s231
    %v234 = vsel %vm232, %v233, %v226
    %s235 = sld [smem:[#allocation9 + $0x10]]
    %vm236 = vcmp.eq.s32.totalorder %v170, 16
    %v237 = vstv %s235
    %v238 = vsel %vm236, %v237, %v230
    %v239 = vadd.f32 %v116, %v112
    %v240 = vadd.f32 %v169, %v165
    %v241 = vadd.f32 %v238, %v234
    %v242 = vadd.f32 %v239, %v240
    %v243 = vadd.f32 %v242, %v241
    %244 = vst [vmem:[#allocation10] sm:$0x1] %v243
    // Predicated region
    $region42: #{tpu_custom_call.1} parent=1 // pred_check
      _
    $region43: #{tpu_custom_call.1} parent=1 // pred_check_branch
      %246 = sbr.rel (0) target = $region45
    $region44: #{tpu_custom_call.1} parent=1 // pred_region
      %s248 = ssub.s32 16, 16
      %249 = vsyncadd [#allocation4], %s248
      %s251 = sshll.u32 [#allocation10], 4
      %s252 = int_to_ptr.vmem [resolvable:$true] %s251
      %254 = dma.vmem_to_hbm [thread:$0]  %s252, 16, %s6, [#allocation4]
    $region45: #{tpu_custom_call.1} parent=1 // pred_fallthru
      _
    // Predicated region
    $region46: #{tpu_custom_call.1} parent=1 // pred_check
      _
    $region47: #{tpu_custom_call.1} parent=1 // pred_check_branch
      %256 = sbr.rel (0) target = $region49
    $region48: #{tpu_custom_call.1} parent=1 // pred_region
      %257 = dma.done [#allocation4], 16
    $region49: #{tpu_custom_call.1} parent=1 // pred_fallthru
      _
    %258 = vsyncpa [#allocation3], 1
    %259 = vsyncpa [#allocation4], 1
    %260 = vsyncpa [#allocation5], 1
    %261 = vsyncpa [#allocation8], 1

</llo_original>
